<compile_context>
chip_gen: v5e
topology: v5e:2x2
jax: 0.10.0
libtpu: 0.0.40
codegen_flags: <defaults>
</compile_context>

<pallas_src>
import math
import functools

import jax
import jax.numpy as jnp
from jax.experimental import pallas as pl
from jax.experimental.pallas import tpu as pltpu


def _mha_kernel(x_ref, wqkv_ref, wout_ref, bout_ref, hsum_ref, hexp_ref, o_ref,
                *, batch, seq_len, num_heads, head_dim):
    B, S, H, hd = batch, seq_len, num_heads, head_dim
    E = H * hd
    R = B * S                                   # total rows across the batch
    inv_sqrt_d = 1.0 / math.sqrt(hd)

    x = x_ref[...]                              # (R, E), lane-dense

    # (1) QKV projection: one lane-dense MXU op, (R,E)@(E,3E) -> (R,3E).
    qkv = jnp.dot(x, wqkv_ref[...], preferred_element_type=jnp.float32)   # (R, 3E)
    q = qkv[:, :E] * inv_sqrt_d                 # fold 1/sqrt(d_k) into Q
    k = qkv[:, E:2 * E]
    v = qkv[:, 2 * E:]

    # Split the row axis back into (B, S); sublane-tile aligned, layout preserving.
    q3 = q.reshape(B, S, E)
    k3 = k.reshape(B, S, E)
    v3 = v.reshape(B, S, E)

    # (2) scores[b,i,j,h] = sum_d q[b,i,h,d] * k[b,j,h,d]
    #     VPU outer product over (i,j), then per-head lane-group sum via one
    #     small lane-dense matmul with the 0/1 head-sum matrix (E,H).
    qb = jnp.broadcast_to(jnp.expand_dims(q3, 2), (B, S, S, E))   # q[b,i,:] along j
    kb = jnp.broadcast_to(jnp.expand_dims(k3, 1), (B, S, S, E))   # k[b,j,:] along i
    prod = (qb * kb).reshape(B * S * S, E)                        # rows = (b,i,j)
    scores = jnp.dot(prod, hsum_ref[...],
                     preferred_element_type=jnp.float32)          # (B*S*S, H)

    # (3) Numerically stable softmax over j (sublane axis of each (S,H) tile).
    scores = scores.reshape(R, S, H)                              # (b*S+i, j, h)
    m = jnp.max(scores, axis=1, keepdims=True)
    e = jnp.exp(scores - m)
    denom = jnp.sum(e, axis=1, keepdims=True)
    attn = e * pl.reciprocal(denom, approx=False)                 # exact recip

    # (4) ctx[b,i,h,d] = sum_j attn[b,i,j,h] * v[b,j,h,d]
    #     Expand head lanes h -> (h,d) lanes with one 0/1 (H,E) matmul, multiply by
    #     broadcast V, reduce over the j sublane axis.
    attn_e = jnp.dot(attn.reshape(B * S * S, H), hexp_ref[...],
                     preferred_element_type=jnp.float32)          # (B*S*S, E)
    vb = jnp.broadcast_to(jnp.expand_dims(v3, 1),
                          (B, S, S, E)).reshape(B * S * S, E)     # v[b,j,:] per (b,i,j)
    ctx = jnp.sum((attn_e * vb).reshape(R, S, E), axis=1)         # (R, E)

    # (5) out_proj: heads already concatenated along lanes -> one matmul, K=E.
    out = jnp.dot(ctx, wout_ref[...], preferred_element_type=jnp.float32)
    out = out + bout_ref[...].astype(jnp.float32)                 # bias added once
    o_ref[...] = out.astype(o_ref.dtype)                          # one dense store


def multi_head_attention(x, w_qkv, w_out, b_out, *, num_heads):
    """x: (B, S, E); w_qkv: (3E, E); w_out: (E, E); b_out: (E,)  (PyTorch layouts)."""
    B, S, E = x.shape
    assert E % num_heads == 0, "embed_dim must be divisible by num_heads"
    head_dim = E // num_heads
    R = B * S

    # One-time re-layouts outside the kernel: lane-dense 2-D weight slabs.
    x2d = x.reshape(R, E)
    wqkv_t = jnp.transpose(w_qkv)               # (E, 3E)  (qkv_bias=False)
    wout_t = jnp.transpose(w_out)               # (E, E)
    bout2d = b_out.reshape(1, E)

    # 0/1 head-grouping matrices (columns of Q/K/V are head-major: e = h*hd + d).
    head_of_e = jnp.arange(E) // head_dim                               # (E,)
    hsum = (head_of_e[:, None] == jnp.arange(num_heads)[None, :]).astype(x.dtype)  # (E, H)
    hexp = jnp.transpose(hsum)                                          # (H, E)

    kernel = functools.partial(_mha_kernel, batch=B, seq_len=S,
                               num_heads=num_heads, head_dim=head_dim)

    out2d = pl.pallas_call(
        kernel,
        out_shape=jax.ShapeDtypeStruct((R, E), x.dtype),
        grid_spec=pltpu.PrefetchScalarGridSpec(
            num_scalar_prefetch=0,
            grid=(1,),                                       # single fused step
            in_specs=[
                pl.BlockSpec((R, E), lambda i: (0, 0)),          # x (all rows)
                pl.BlockSpec((E, 3 * E), lambda i: (0, 0)),      # WqkvT slab
                pl.BlockSpec((E, E), lambda i: (0, 0)),          # WoutT slab
                pl.BlockSpec((1, E), lambda i: (0, 0)),          # bias
                pl.BlockSpec((E, num_heads), lambda i: (0, 0)),  # head-sum matrix
                pl.BlockSpec((num_heads, E), lambda i: (0, 0)),  # head-expand matrix
            ],
            out_specs=pl.BlockSpec((R, E), lambda i: (0, 0)),
        ),
        compiler_params=pltpu.CompilerParams(
            dimension_semantics=("arbitrary",)),
    )(x2d, wqkv_t, wout_t, bout2d, hsum, hexp)

    return out2d.reshape(B, S, E)


def multi_head_attention_ref(x, w_qkv, w_out, b_out, *, num_heads):
    """Pure-JAX reference mirroring the PyTorch module (eval mode, mask=None)."""
    B, S, E = x.shape
    hd = E // num_heads
    qkv = jnp.einsum('bse,oe->bso', x, w_qkv)                    # (B, S, 3E)
    qkv = qkv.reshape(B, S, 3, num_heads, hd).transpose(2, 0, 3, 1, 4)
    q, k, v = qkv[0], qkv[1], qkv[2]                             # (B, H, S, hd)
    scores = jnp.einsum('bhqd,bhkd->bhqk', q, k) / math.sqrt(hd)
    attn = jax.nn.softmax(scores, axis=-1)
    out = jnp.einsum('bhqk,bhkd->bhqd', attn, v)                 # (B, H, S, hd)
    out = out.transpose(0, 2, 1, 3).reshape(B, S, E)
    return jnp.einsum('bse,oe->bso', out, w_out) + b_out


if __name__ == "__main__":
    # Module config: embed_dim=32, num_heads=8 -> head_dim=4; qkv_bias=False.
    batch, seq_len, embed_dim, num_heads = 2, 8, 32, 8

    key = jax.random.PRNGKey(0)
    k_x, k_wqkv, k_wout, k_bout = jax.random.split(key, 4)

    x = jax.random.normal(k_x, (batch, seq_len, embed_dim), dtype=jnp.float32)
    # Deterministic synthetic parameters (PyTorch Linear layout: (out, in)).
    w_qkv = jax.random.normal(k_wqkv, (3 * embed_dim, embed_dim), jnp.float32) * 0.05
    w_out = jax.random.normal(k_wout, (embed_dim, embed_dim), jnp.float32) * 0.05
    b_out = jax.random.normal(k_bout, (embed_dim,), jnp.float32) * 0.05

    out = multi_head_attention(x, w_qkv, w_out, b_out, num_heads=num_heads)
    out = jax.block_until_ready(out)

    ref = multi_head_attention_ref(x, w_qkv, w_out, b_out, num_heads=num_heads)
    assert out.shape == (batch, seq_len, embed_dim)
    assert jnp.allclose(out, ref, atol=1e-3, rtol=1e-3), \
        f"max abs err {jnp.max(jnp.abs(out - ref))}"

    print("KERNEL_OK")
</pallas_src>

<mosaic_0001>
module attributes {stable_mosaic.version = 11 : i64} {
  func.func @_mha_kernel(%arg0: i32, %arg1: memref<16x32xf32, #tpu.memory_space<vmem>>, %arg2: memref<32x96xf32, #tpu.memory_space<vmem>>, %arg3: memref<32x32xf32, #tpu.memory_space<vmem>>, %arg4: memref<1x32xf32, #tpu.memory_space<vmem>>, %arg5: memref<32x8xf32, #tpu.memory_space<vmem>>, %arg6: memref<8x32xf32, #tpu.memory_space<vmem>>, %arg7: memref<16x32xf32, #tpu.memory_space<vmem>>) attributes {dimension_semantics = [#tpu.dimension_semantics<arbitrary>], iteration_bounds = array<i64: 1>, scalar_prefetch = 0 : i64, scratch_operands = 0 : i64, tpu.core_type = #tpu.core_type<tc>, window_params = [{pipeline_mode = #tpu.pipeline_mode<synchronous>, transform_indices = @transform_0, window_bounds = array<i64: 16, 32>}, {pipeline_mode = #tpu.pipeline_mode<synchronous>, transform_indices = @transform_1, window_bounds = array<i64: 32, 96>}, {pipeline_mode = #tpu.pipeline_mode<synchronous>, transform_indices = @transform_2, window_bounds = array<i64: 32, 32>}, {pipeline_mode = #tpu.pipeline_mode<synchronous>, transform_indices = @transform_3, window_bounds = array<i64: 1, 32>}, {pipeline_mode = #tpu.pipeline_mode<synchronous>, transform_indices = @transform_4, window_bounds = array<i64: 32, 8>}, {pipeline_mode = #tpu.pipeline_mode<synchronous>, transform_indices = @transform_5, window_bounds = array<i64: 8, 32>}, {pipeline_mode = #tpu.pipeline_mode<synchronous>, transform_indices = @transform_6, window_bounds = array<i64: 16, 32>}]} {
    %c0 = arith.constant 0 : index
    %c0_0 = arith.constant 0 : index
    %0 = vector.load %arg1[%c0, %c0_0] : memref<16x32xf32, #tpu.memory_space<vmem>>, vector<16x32xf32>
    %c0_1 = arith.constant 0 : index
    %c0_2 = arith.constant 0 : index
    %1 = vector.load %arg2[%c0_1, %c0_2] : memref<32x96xf32, #tpu.memory_space<vmem>>, vector<32x96xf32>
    %cst = arith.constant dense<0.000000e+00> : vector<16x96xf32>
    %2 = tpu.matmul %0, %1, %cst {dimension_numbers = #tpu.dot_dimension_numbers<[1], [0], [0], [1], [0, 0, 1, 1], [], []>} : vector<16x32xf32>, vector<32x96xf32>, vector<16x96xf32> -> vector<16x96xf32>
    %3 = vector.extract_strided_slice %2 {offsets = [0, 0], sizes = [16, 32], strides = [1, 1]} : vector<16x96xf32> to vector<16x32xf32>
    %cst_3 = arith.constant 5.000000e-01 : f32
    %4 = vector.broadcast %cst_3 : f32 to vector<16x32xf32>
    %5 = arith.mulf %3, %4 : vector<16x32xf32>
    %6 = vector.extract_strided_slice %2 {offsets = [0, 32], sizes = [16, 32], strides = [1, 1]} : vector<16x96xf32> to vector<16x32xf32>
    %7 = vector.extract_strided_slice %2 {offsets = [0, 64], sizes = [16, 32], strides = [1, 1]} : vector<16x96xf32> to vector<16x32xf32>
    %8 = vector.shape_cast %5 : vector<16x32xf32> to vector<2x8x32xf32>
    %9 = vector.shape_cast %6 : vector<16x32xf32> to vector<2x8x32xf32>
    %10 = vector.shape_cast %7 : vector<16x32xf32> to vector<2x8x32xf32>
    %11 = vector.shape_cast %8 : vector<2x8x32xf32> to vector<2x8x1x32xf32>
    %12 = vector.shape_cast %11 : vector<2x8x1x32xf32> to vector<2x8x1x32xf32>
    %13 = vector.broadcast %12 : vector<2x8x1x32xf32> to vector<2x8x8x32xf32>
    %14 = vector.shape_cast %9 : vector<2x8x32xf32> to vector<2x1x8x32xf32>
    %15 = vector.shape_cast %14 : vector<2x1x8x32xf32> to vector<2x1x8x32xf32>
    %16 = vector.broadcast %15 : vector<2x1x8x32xf32> to vector<2x8x8x32xf32>
    %17 = arith.mulf %13, %16 : vector<2x8x8x32xf32>
    %18 = vector.shape_cast %17 : vector<2x8x8x32xf32> to vector<128x32xf32>
    %c0_4 = arith.constant 0 : index
    %c0_5 = arith.constant 0 : index
    %19 = vector.load %arg5[%c0_4, %c0_5] : memref<32x8xf32, #tpu.memory_space<vmem>>, vector<32x8xf32>
    %cst_6 = arith.constant dense<0.000000e+00> : vector<128x8xf32>
    %20 = tpu.matmul %18, %19, %cst_6 {dimension_numbers = #tpu.dot_dimension_numbers<[1], [0], [0], [1], [0, 0, 1, 1], [], []>} : vector<128x32xf32>, vector<32x8xf32>, vector<128x8xf32> -> vector<128x8xf32>
    %21 = vector.shape_cast %20 : vector<128x8xf32> to vector<16x8x8xf32>
    %cst_7 = arith.constant dense<0xFF800000> : vector<16x8xf32>
    %22 = vector.multi_reduction <maximumf>, %21, %cst_7 [1] : vector<16x8x8xf32> to vector<16x8xf32>
    %23 = vector.shape_cast %22 : vector<16x8xf32> to vector<16x1x8xf32>
    %24 = vector.broadcast %23 : vector<16x1x8xf32> to vector<16x8x8xf32>
    %25 = arith.subf %21, %24 : vector<16x8x8xf32>
    %26 = math.exp %25 : vector<16x8x8xf32>
    %cst_8 = arith.constant dense<0.000000e+00> : vector<16x8xf32>
    %27 = vector.multi_reduction <add>, %26, %cst_8 [1] : vector<16x8x8xf32> to vector<16x8xf32>
    %28 = vector.shape_cast %27 : vector<16x8xf32> to vector<16x1x8xf32>
    %29 = tpu.reciprocal %28 : vector<16x1x8xf32> -> vector<16x1x8xf32>
    %30 = vector.broadcast %29 : vector<16x1x8xf32> to vector<16x8x8xf32>
    %31 = arith.mulf %26, %30 : vector<16x8x8xf32>
    %32 = vector.shape_cast %31 : vector<16x8x8xf32> to vector<128x8xf32>
    %c0_9 = arith.constant 0 : index
    %c0_10 = arith.constant 0 : index
    %33 = vector.load %arg6[%c0_9, %c0_10] : memref<8x32xf32, #tpu.memory_space<vmem>>, vector<8x32xf32>
    %cst_11 = arith.constant dense<0.000000e+00> : vector<128x32xf32>
    %34 = tpu.matmul %32, %33, %cst_11 {dimension_numbers = #tpu.dot_dimension_numbers<[1], [0], [0], [1], [0, 0, 1, 1], [], []>} : vector<128x8xf32>, vector<8x32xf32>, vector<128x32xf32> -> vector<128x32xf32>
    %35 = vector.shape_cast %10 : vector<2x8x32xf32> to vector<2x1x8x32xf32>
    %36 = vector.shape_cast %35 : vector<2x1x8x32xf32> to vector<2x1x8x32xf32>
    %37 = vector.broadcast %36 : vector<2x1x8x32xf32> to vector<2x8x8x32xf32>
    %38 = vector.shape_cast %37 : vector<2x8x8x32xf32> to vector<128x32xf32>
    %39 = arith.mulf %34, %38 : vector<128x32xf32>
    %40 = vector.shape_cast %39 : vector<128x32xf32> to vector<16x8x32xf32>
    %cst_12 = arith.constant dense<0.000000e+00> : vector<16x32xf32>
    %41 = vector.multi_reduction <add>, %40, %cst_12 [1] : vector<16x8x32xf32> to vector<16x32xf32>
    %c0_13 = arith.constant 0 : index
    %c0_14 = arith.constant 0 : index
    %42 = vector.load %arg3[%c0_13, %c0_14] : memref<32x32xf32, #tpu.memory_space<vmem>>, vector<32x32xf32>
    %cst_15 = arith.constant dense<0.000000e+00> : vector<16x32xf32>
    %43 = tpu.matmul %41, %42, %cst_15 {dimension_numbers = #tpu.dot_dimension_numbers<[1], [0], [0], [1], [0, 0, 1, 1], [], []>} : vector<16x32xf32>, vector<32x32xf32>, vector<16x32xf32> -> vector<16x32xf32>
    %c0_16 = arith.constant 0 : index
    %c0_17 = arith.constant 0 : index
    %44 = vector.load %arg4[%c0_16, %c0_17] : memref<1x32xf32, #tpu.memory_space<vmem>>, vector<1x32xf32>
    %45 = vector.broadcast %44 : vector<1x32xf32> to vector<16x32xf32>
    %46 = arith.addf %43, %45 : vector<16x32xf32>
    %c0_18 = arith.constant 0 : index
    %c0_19 = arith.constant 0 : index
    %47 = vector.load %arg7[%c0_18, %c0_19] : memref<16x32xf32, #tpu.memory_space<vmem>>, vector<16x32xf32>
    tpu.vector_store %arg7[%c0_18, %c0_19], %46 {strides = array<i32>} : memref<16x32xf32, #tpu.memory_space<vmem>>, vector<16x32xf32>,
    return
  }
  func.func @transform_0(%arg0: i32) -> (i32, i32) {
    %c0_i32 = arith.constant 0 : i32
    %c0_i32_0 = arith.constant 0 : i32
    %c0_i32_1 = arith.constant 0 : i32
    return %c0_i32, %c0_i32_0 : i32, i32
  }
  func.func @transform_1(%arg0: i32) -> (i32, i32) {
    %c0_i32 = arith.constant 0 : i32
    %c0_i32_0 = arith.constant 0 : i32
    %c0_i32_1 = arith.constant 0 : i32
    return %c0_i32, %c0_i32_0 : i32, i32
  }
  func.func @transform_2(%arg0: i32) -> (i32, i32) {
    %c0_i32 = arith.constant 0 : i32
    %c0_i32_0 = arith.constant 0 : i32
    %c0_i32_1 = arith.constant 0 : i32
    return %c0_i32, %c0_i32_0 : i32, i32
  }
  func.func @transform_3(%arg0: i32) -> (i32, i32) {
    %c0_i32 = arith.constant 0 : i32
    %c0_i32_0 = arith.constant 0 : i32
    %c0_i32_1 = arith.constant 0 : i32
    return %c0_i32, %c0_i32_0 : i32, i32
  }
  func.func @transform_4(%arg0: i32) -> (i32, i32) {
    %c0_i32 = arith.constant 0 : i32
    %c0_i32_0 = arith.constant 0 : i32
    %c0_i32_1 = arith.constant 0 : i32
    return %c0_i32, %c0_i32_0 : i32, i32
  }
  func.func @transform_5(%arg0: i32) -> (i32, i32) {
    %c0_i32 = arith.constant 0 : i32
    %c0_i32_0 = arith.constant 0 : i32
    %c0_i32_1 = arith.constant 0 : i32
    return %c0_i32, %c0_i32_0 : i32, i32
  }
  func.func @transform_6(%arg0: i32) -> (i32, i32) {
    %c0_i32 = arith.constant 0 : i32
    %c0_i32_0 = arith.constant 0 : i32
    %c0_i32_1 = arith.constant 0 : i32
    return %c0_i32, %c0_i32_0 : i32, i32
  }
}

</mosaic_0001>

<llo_original>
// kernel: tpu_custom_call.1
$region0: #{tpu_custom_call.1}
  #allocation0 [shape = 'u32[]', space=smem, size = 0x4, offset = 0x4, fixed_abs, tag = 'smem constant byte address 0x4 - core index']
  #allocation1 [shape = 'u32[72,128]{1,0:T(1,128)}', space=vmem, size = 0x9000, scoped, tag = 'internal scratch']
  %s0 = inlined_call_operand.hbm [shape: f32[16,32], index: 0, kind: input, shape index: {}]
  %s1 = inlined_call_operand.vmem [shape: f32[32,96], index: 1, kind: input, shape index: {}]
  %s2 = inlined_call_operand.hbm [shape: f32[32,32], index: 2, kind: input, shape index: {}]
  %s3 = inlined_call_operand.vmem [shape: f32[1,32], index: 3, kind: input, shape index: {}]
  %s4 = inlined_call_operand.vmem [shape: f32[32,8], index: 4, kind: input, shape index: {}]
  %s5 = inlined_call_operand.vmem [shape: f32[8,32], index: 5, kind: input, shape index: {}]
  %s6 = inlined_call_operand.hbm [shape: f32[16,32], index: 6, kind: output, shape index: {}]
  %s7 = sld [smem:[#allocation0]]
  $region42: #{tpu_custom_call.1} parent=0
    _
  %s9 = ssub.s32 1, %s7
  %s10 = scalar_select 0, %s9, %s7
  $region1: #{tpu_custom_call.1} parent=0
    #allocation2 [shape = 'u8[8192]{0}', space=vmem, size = 0x2000, scoped, tag = 'input window, operand 0, single buffered']
    #allocation3 [shape = 's32[1]{0}', space=sflag, size = 0x4, scoped, tag = 'scoped memory for tpu_custom_call.1']
    #allocation4 [shape = 's32[1]{0}', space=sflag, size = 0x4, scoped, tag = 'scoped memory for tpu_custom_call.1']
    #allocation5 [shape = 'u8[16384]{0}', space=vmem, size = 0x4000, scoped, tag = 'input window, operand 2, single buffered']
    #allocation6 [shape = 's32[1]{0}', space=sflag, size = 0x4, scoped, tag = 'scoped memory for tpu_custom_call.1']
    #allocation7 [shape = 'u8[8192]{0}', space=vmem, size = 0x2000, scoped, tag = 'output window, operand 0, single buffered']
    %11 = vsyncpa [#allocation3], 0
    %12 = vsyncpa [#allocation6], 0
    %13 = vsyncpa [#allocation4], 0
    // Predicated region
    $region2: #{tpu_custom_call.1} parent=1 // pred_check
      _
    $region3: #{tpu_custom_call.1} parent=1 // pred_check_branch
      %15 = sbr.rel (0) target = $region5
    $region4: #{tpu_custom_call.1} parent=1 // pred_region
      %17 = vsyncadd [#allocation3], 0
      %s18 = sshll.u32 %s0, 4
      %s19 = int_to_ptr.hbm [resolvable:$true] %s18
      %s20 = sshll.u32 [#allocation2], 4
      %s21 = int_to_ptr.vmem [resolvable:$true] %s20
      %26 = dma.hbm_to_vmem [thread:$0]  %s19, 256, %s21, [#allocation3], 128, 128, 8
    $region5: #{tpu_custom_call.1} parent=1 // pred_fallthru
      _
    // Predicated region
    $region6: #{tpu_custom_call.1} parent=1 // pred_check
      _
    $region7: #{tpu_custom_call.1} parent=1 // pred_check_branch
      %28 = sbr.rel (0) target = $region9
    $region8: #{tpu_custom_call.1} parent=1 // pred_region
      _
    $region9: #{tpu_custom_call.1} parent=1 // pred_fallthru
      _
    // Predicated region
    $region10: #{tpu_custom_call.1} parent=1 // pred_check
      _
    $region11: #{tpu_custom_call.1} parent=1 // pred_check_branch
      %30 = sbr.rel (0) target = $region13
    $region12: #{tpu_custom_call.1} parent=1 // pred_region
      %32 = vsyncadd [#allocation6], 0
      %s33 = sshll.u32 %s2, 4
      %s34 = int_to_ptr.hbm [resolvable:$true] %s33
      %s35 = sshll.u32 [#allocation5], 4
      %s36 = int_to_ptr.vmem [resolvable:$true] %s35
      %41 = dma.hbm_to_vmem [thread:$0]  %s34, 512, %s36, [#allocation6], 128, 128, 8
    $region13: #{tpu_custom_call.1} parent=1 // pred_fallthru
      _
    // Predicated region
    $region14: #{tpu_custom_call.1} parent=1 // pred_check
      _
    $region15: #{tpu_custom_call.1} parent=1 // pred_check_branch
      %43 = sbr.rel (0) target = $region17
    $region16: #{tpu_custom_call.1} parent=1 // pred_region
      _
    $region17: #{tpu_custom_call.1} parent=1 // pred_fallthru
      _
    // Predicated region
    $region18: #{tpu_custom_call.1} parent=1 // pred_check
      _
    $region19: #{tpu_custom_call.1} parent=1 // pred_check_branch
      %45 = sbr.rel (0) target = $region21
    $region20: #{tpu_custom_call.1} parent=1 // pred_region
      _
    $region21: #{tpu_custom_call.1} parent=1 // pred_fallthru
      _
    // Predicated region
    $region22: #{tpu_custom_call.1} parent=1 // pred_check
      _
    $region23: #{tpu_custom_call.1} parent=1 // pred_check_branch
      %47 = sbr.rel (0) target = $region25
    $region24: #{tpu_custom_call.1} parent=1 // pred_region
      _
    $region25: #{tpu_custom_call.1} parent=1 // pred_fallthru
      _
    // Predicated region
    $region26: #{tpu_custom_call.1} parent=1 // pred_check
      _
    $region27: #{tpu_custom_call.1} parent=1 // pred_check_branch
      %49 = sbr.rel (0) target = $region29
    $region28: #{tpu_custom_call.1} parent=1 // pred_region
      %51 = dma.done [#allocation3], 256
    $region29: #{tpu_custom_call.1} parent=1 // pred_fallthru
      _
    // Predicated region
    $region30: #{tpu_custom_call.1} parent=1 // pred_check
      _
    $region31: #{tpu_custom_call.1} parent=1 // pred_check_branch
      %53 = sbr.rel (0) target = $region33
    $region32: #{tpu_custom_call.1} parent=1 // pred_region
      %55 = dma.done [#allocation6], 512
    $region33: #{tpu_custom_call.1} parent=1 // pred_fallthru
      _
    %v56 = vld [vmem:[#allocation2] sm:$0xff]
    %v57 = vld [vmem:[#allocation2 + $0x8] sm:$0xff]
    %v58 = vld [vmem:[%s1] sm:$0xff]
    %v59 = vld [vmem:[%s1 + $0x8] sm:$0xff]
    %v60 = vld [vmem:[%s1 + $0x10] sm:$0xff]
    %v61 = vld [vmem:[%s1 + $0x18] sm:$0xff]
    %vm62 = vcmask 261120
    %v64 = vsel %vm62, %v56, 0
    %v67 = vsel %vm62, %v57, 0
    %69 = vmatpush.msra.mxu0 0.0
    %70 = vmatpush.msra.mxu0 0.0
    %71 = vmatpush.msra.mxu0 0.0
    %72 = vmatpush.msra.mxu0 0.0
    %73 = vmatpush.msra.mxu0 0.0
    %74 = vmatpush.msra.mxu0 0.0
    %75 = vmatpush.msra.mxu0 0.0
    %76 = vmatpush.msra.mxu0 0.0
    %77 = vmatpush.msra.mxu0 0.0
    %78 = vmatpush.msra.mxu0 0.0
    %79 = vmatpush.msra.mxu0 0.0
    %80 = vmatpush.msra.mxu0 0.0
    %81 = vmatpush.msra.mxu0 %v61
    %82 = vmatpush.msra.mxu0 %v60
    %83 = vmatpush.msra.mxu0 %v59
    %84 = vmatpush.msra.mxu0 %v58
    %85 = vmatmul.f32.gmra.mxu0 %v64
    %v86 = vpop.f32.mrf.mxu0
    %v87 = vadd.f32 0.0, %v86
    %88 = vmatmul.f32.gmra.mxu0 %v67
    %v89 = vpop.f32.mrf.mxu0
    %v90 = vadd.f32 0.0, %v89
    %91 = vdwg.mxu0
    %v92 = vmul.f32 %v87, 0.5
    %v93 = vmul.f32 %v90, 0.5
    %v96 = vrot.slane %v92, 1
    %v97 = vrot.slane %v92, 2
    %v98 = vrot.slane %v92, 3
    %v99 = vrot.slane %v92, 4
    %v100 = vrot.slane %v92, 5
    %v101 = vrot.slane %v92, 6
    %v102 = vrot.slane %v92, 7
    %v103 = vrot.slane %v93, 1
    %v104 = vrot.slane %v93, 2
    %v105 = vrot.slane %v93, 3
    %v106 = vrot.slane %v93, 4
    %v107 = vrot.slane %v93, 5
    %v108 = vrot.slane %v93, 6
    %v109 = vrot.slane %v93, 7
    %v110 = vperm.slane %v92, 0
    %v111 = vperm.slane %v96, 0
    %v112 = vperm.slane %v97, 0
    %v113 = vperm.slane %v98, 0
    %v114 = vperm.slane %v99, 0
    %v115 = vperm.slane %v100, 0
    %v116 = vperm.slane %v101, 0
    %v117 = vperm.slane %v102, 0
    %v118 = vperm.slane %v93, 0
    %v119 = vperm.slane %v103, 0
    %v120 = vperm.slane %v104, 0
    %v121 = vperm.slane %v105, 0
    %v122 = vperm.slane %v106, 0
    %v123 = vperm.slane %v107, 0
    %v124 = vperm.slane %v108, 0
    %v125 = vperm.slane %v109, 0
    %144 = vrot.lane.b32.xlu0 %v87, 96
    %v145 = vpop.permute.xlu0 %144
    %146 = vrot.lane.b32.xlu0 %v90, 96
    %v147 = vpop.permute.xlu0 %146
    %v150 = vmul.f32 %v110, %v145
    %v151 = vmul.f32 %v111, %v145
    %v152 = vmul.f32 %v112, %v145
    %v153 = vmul.f32 %v113, %v145
    %v154 = vmul.f32 %v114, %v145
    %v155 = vmul.f32 %v115, %v145
    %v156 = vmul.f32 %v116, %v145
    %v157 = vmul.f32 %v117, %v145
    %v158 = vmul.f32 %v118, %v147
    %v159 = vmul.f32 %v119, %v147
    %v160 = vmul.f32 %v120, %v147
    %v161 = vmul.f32 %v121, %v147
    %v162 = vmul.f32 %v122, %v147
    %v163 = vmul.f32 %v123, %v147
    %v164 = vmul.f32 %v124, %v147
    %v165 = vmul.f32 %v125, %v147
    %v166 = vld [vmem:[%s4] sm:$0xff]
    %v167 = vld [vmem:[%s4 + $0x8] sm:$0xff]
    %v168 = vld [vmem:[%s4 + $0x10] sm:$0xff]
    %v169 = vld [vmem:[%s4 + $0x18] sm:$0xff]
    %v171 = vsel %vm62, %v150, 0
    %v174 = vsel %vm62, %v151, 0
    %v177 = vsel %vm62, %v152, 0
    %v180 = vsel %vm62, %v153, 0
    %v183 = vsel %vm62, %v154, 0
    %v186 = vsel %vm62, %v155, 0
    %v189 = vsel %vm62, %v156, 0
    %v192 = vsel %vm62, %v157, 0
    %v195 = vsel %vm62, %v158, 0
    %v198 = vsel %vm62, %v159, 0
    %v201 = vsel %vm62, %v160, 0
    %v204 = vsel %vm62, %v161, 0
    %v207 = vsel %vm62, %v162, 0
    %v210 = vsel %vm62, %v163, 0
    %v213 = vsel %vm62, %v164, 0
    %v216 = vsel %vm62, %v165, 0
    %218 = vmatpush.msra.mxu0 0.0
    %219 = vmatpush.msra.mxu0 0.0
    %220 = vmatpush.msra.mxu0 0.0
    %221 = vmatpush.msra.mxu0 0.0
    %222 = vmatpush.msra.mxu0 0.0
    %223 = vmatpush.msra.mxu0 0.0
    %224 = vmatpush.msra.mxu0 0.0
    %225 = vmatpush.msra.mxu0 0.0
    %226 = vmatpush.msra.mxu0 0.0
    %227 = vmatpush.msra.mxu0 0.0
    %228 = vmatpush.msra.mxu0 0.0
    %229 = vmatpush.msra.mxu0 0.0
    %230 = vmatpush.msra.mxu0 %v169
    %231 = vmatpush.msra.mxu0 %v168
    %232 = vmatpush.msra.mxu0 %v167
    %233 = vmatpush.msra.mxu0 %v166
    %234 = vmatmul.f32.gmra.mxu0 %v171
    %v235 = vpop.f32.mrf.mxu0
    %v236 = vadd.f32 0.0, %v235
    %237 = vmatmul.f32.gmra.mxu0 %v174
    %v238 = vpop.f32.mrf.mxu0
    %v239 = vadd.f32 0.0, %v238
    %240 = vmatmul.f32.gmra.mxu0 %v177
    %v241 = vpop.f32.mrf.mxu0
    %v242 = vadd.f32 0.0, %v241
    %243 = vmatmul.f32.gmra.mxu0 %v180
    %v244 = vpop.f32.mrf.mxu0
    %v245 = vadd.f32 0.0, %v244
    %246 = vmatmul.f32.gmra.mxu0 %v183
    %v247 = vpop.f32.mrf.mxu0
    %v248 = vadd.f32 0.0, %v247
    %249 = vmatmul.f32.gmra.mxu0 %v186
    %v250 = vpop.f32.mrf.mxu0
    %v251 = vadd.f32 0.0, %v250
    %252 = vmatmul.f32.gmra.mxu0 %v189
    %v253 = vpop.f32.mrf.mxu0
    %v254 = vadd.f32 0.0, %v253
    %255 = vmatmul.f32.gmra.mxu0 %v192
    %v256 = vpop.f32.mrf.mxu0
    %v257 = vadd.f32 0.0, %v256
    %258 = vmatmul.f32.gmra.mxu0 %v195
    %v259 = vpop.f32.mrf.mxu0
    %v260 = vadd.f32 0.0, %v259
    %261 = vmatmul.f32.gmra.mxu0 %v198
    %v262 = vpop.f32.mrf.mxu0
    %v263 = vadd.f32 0.0, %v262
    %264 = vmatmul.f32.gmra.mxu0 %v201
    %v265 = vpop.f32.mrf.mxu0
    %v266 = vadd.f32 0.0, %v265
    %267 = vmatmul.f32.gmra.mxu0 %v204
    %v268 = vpop.f32.mrf.mxu0
    %v269 = vadd.f32 0.0, %v268
    %270 = vmatmul.f32.gmra.mxu0 %v207
    %v271 = vpop.f32.mrf.mxu0
    %v272 = vadd.f32 0.0, %v271
    %273 = vmatmul.f32.gmra.mxu0 %v210
    %v274 = vpop.f32.mrf.mxu0
    %v275 = vadd.f32 0.0, %v274
    %276 = vmatmul.f32.gmra.mxu0 %v213
    %v277 = vpop.f32.mrf.mxu0
    %v278 = vadd.f32 0.0, %v277
    %279 = vmatmul.f32.gmra.mxu0 %v216
    %v280 = vpop.f32.mrf.mxu0
    %v281 = vadd.f32 0.0, %v280
    %282 = vdwg.mxu0
    %vm283 = vcmask 64512
    %v284 = vsel %vm283, %v236, -inf
    %v285 = vrot.slane %v284, 4
    %v286 = vmax.f32 %v284, %v285
    %v287 = vrot.slane %v286, 2
    %v288 = vmax.f32 %v286, %v287
    %v289 = vrot.slane %v288, 1
    %v290 = vmax.f32 %v288, %v289
    %v291 = vsel %vm283, %v239, -inf
    %v292 = vrot.slane %v291, 4
    %v293 = vmax.f32 %v291, %v292
    %v294 = vrot.slane %v293, 2
    %v295 = vmax.f32 %v293, %v294
    %v296 = vrot.slane %v295, 1
    %v297 = vmax.f32 %v295, %v296
    %v298 = vsel %vm283, %v242, -inf
    %v299 = vrot.slane %v298, 4
    %v300 = vmax.f32 %v298, %v299
    %v301 = vrot.slane %v300, 2
    %v302 = vmax.f32 %v300, %v301
    %v303 = vrot.slane %v302, 1
    %v304 = vmax.f32 %v302, %v303
    %v305 = vsel %vm283, %v245, -inf
    %v306 = vrot.slane %v305, 4
    %v307 = vmax.f32 %v305, %v306
    %v308 = vrot.slane %v307, 2
    %v309 = vmax.f32 %v307, %v308
    %v310 = vrot.slane %v309, 1
    %v311 = vmax.f32 %v309, %v310
    %v312 = vsel %vm283, %v248, -inf
    %v313 = vrot.slane %v312, 4
    %v314 = vmax.f32 %v312, %v313
    %v315 = vrot.slane %v314, 2
    %v316 = vmax.f32 %v314, %v315
    %v317 = vrot.slane %v316, 1
    %v318 = vmax.f32 %v316, %v317
    %v319 = vsel %vm283, %v251, -inf
    %v320 = vrot.slane %v319, 4
    %v321 = vmax.f32 %v319, %v320
    %v322 = vrot.slane %v321, 2
    %v323 = vmax.f32 %v321, %v322
    %v324 = vrot.slane %v323, 1
    %v325 = vmax.f32 %v323, %v324
    %v326 = vsel %vm283, %v254, -inf
    %v327 = vrot.slane %v326, 4
    %v328 = vmax.f32 %v326, %v327
    %v329 = vrot.slane %v328, 2
    %v330 = vmax.f32 %v328, %v329
    %v331 = vrot.slane %v330, 1
    %v332 = vmax.f32 %v330, %v331
    %v333 = vsel %vm283, %v257, -inf
    %v334 = vrot.slane %v333, 4
    %v335 = vmax.f32 %v333, %v334
    %v336 = vrot.slane %v335, 2
    %v337 = vmax.f32 %v335, %v336
    %v338 = vrot.slane %v337, 1
    %v339 = vmax.f32 %v337, %v338
    %v340 = vsel %vm283, %v260, -inf
    %v341 = vrot.slane %v340, 4
    %v342 = vmax.f32 %v340, %v341
    %v343 = vrot.slane %v342, 2
    %v344 = vmax.f32 %v342, %v343
    %v345 = vrot.slane %v344, 1
    %v346 = vmax.f32 %v344, %v345
    %v347 = vsel %vm283, %v263, -inf
    %v348 = vrot.slane %v347, 4
    %v349 = vmax.f32 %v347, %v348
    %v350 = vrot.slane %v349, 2
    %v351 = vmax.f32 %v349, %v350
    %v352 = vrot.slane %v351, 1
    %v353 = vmax.f32 %v351, %v352
    %v354 = vsel %vm283, %v266, -inf
    %v355 = vrot.slane %v354, 4
    %v356 = vmax.f32 %v354, %v355
    %v357 = vrot.slane %v356, 2
    %v358 = vmax.f32 %v356, %v357
    %v359 = vrot.slane %v358, 1
    %v360 = vmax.f32 %v358, %v359
    %v361 = vsel %vm283, %v269, -inf
    %v362 = vrot.slane %v361, 4
    %v363 = vmax.f32 %v361, %v362
    %v364 = vrot.slane %v363, 2
    %v365 = vmax.f32 %v363, %v364
    %v366 = vrot.slane %v365, 1
    %v367 = vmax.f32 %v365, %v366
    %v368 = vsel %vm283, %v272, -inf
    %v369 = vrot.slane %v368, 4
    %v370 = vmax.f32 %v368, %v369
    %v371 = vrot.slane %v370, 2
    %v372 = vmax.f32 %v370, %v371
    %v373 = vrot.slane %v372, 1
    %v374 = vmax.f32 %v372, %v373
    %v375 = vsel %vm283, %v275, -inf
    %v376 = vrot.slane %v375, 4
    %v377 = vmax.f32 %v375, %v376
    %v378 = vrot.slane %v377, 2
    %v379 = vmax.f32 %v377, %v378
    %v380 = vrot.slane %v379, 1
    %v381 = vmax.f32 %v379, %v380
    %v382 = vsel %vm283, %v278, -inf
    %v383 = vrot.slane %v382, 4
    %v384 = vmax.f32 %v382, %v383
    %v385 = vrot.slane %v384, 2
    %v386 = vmax.f32 %v384, %v385
    %v387 = vrot.slane %v386, 1
    %v388 = vmax.f32 %v386, %v387
    %v389 = vsel %vm283, %v281, -inf
    %v390 = vrot.slane %v389, 4
    %v391 = vmax.f32 %v389, %v390
    %v392 = vrot.slane %v391, 2
    %v393 = vmax.f32 %v391, %v392
    %v394 = vrot.slane %v393, 1
    %v395 = vmax.f32 %v393, %v394
    %v396 = vsub.f32 %v236, %v290
    %v397 = vsub.f32 %v239, %v297
    %v398 = vsub.f32 %v242, %v304
    %v399 = vsub.f32 %v245, %v311
    %v400 = vsub.f32 %v248, %v318
    %v401 = vsub.f32 %v251, %v325
    %v402 = vsub.f32 %v254, %v332
    %v403 = vsub.f32 %v257, %v339
    %v404 = vsub.f32 %v260, %v346
    %v405 = vsub.f32 %v263, %v353
    %v406 = vsub.f32 %v266, %v360
    %v407 = vsub.f32 %v269, %v367
    %v408 = vsub.f32 %v272, %v374
    %v409 = vsub.f32 %v275, %v381
    %v410 = vsub.f32 %v278, %v388
    %v411 = vsub.f32 %v281, %v395
    %v412 = vmul.f32 %v396, 1.442695
    %v413 = vpow.pop %v412
    %v414 = vmul.f32 %v397, 1.442695
    %v415 = vpow.pop %v414
    %v416 = vmul.f32 %v398, 1.442695
    %v417 = vpow.pop %v416
    %v418 = vmul.f32 %v399, 1.442695
    %v419 = vpow.pop %v418
    %v420 = vmul.f32 %v400, 1.442695
    %v421 = vpow.pop %v420
    %v422 = vmul.f32 %v401, 1.442695
    %v423 = vpow.pop %v422
    %v424 = vmul.f32 %v402, 1.442695
    %v425 = vpow.pop %v424
    %v426 = vmul.f32 %v403, 1.442695
    %v427 = vpow.pop %v426
    %v428 = vmul.f32 %v404, 1.442695
    %v429 = vpow.pop %v428
    %v430 = vmul.f32 %v405, 1.442695
    %v431 = vpow.pop %v430
    %v432 = vmul.f32 %v406, 1.442695
    %v433 = vpow.pop %v432
    %v434 = vmul.f32 %v407, 1.442695
    %v435 = vpow.pop %v434
    %v436 = vmul.f32 %v408, 1.442695
    %v437 = vpow.pop %v436
    %v438 = vmul.f32 %v409, 1.442695
    %v439 = vpow.pop %v438
    %v440 = vmul.f32 %v410, 1.442695
    %v441 = vpow.pop %v440
    %v442 = vmul.f32 %v411, 1.442695
    %v443 = vpow.pop %v442
    %v444 = vsel %vm283, %v413, 0.0
    %v445 = vrot.slane %v444, 4
    %v446 = vadd.f32 %v444, %v445
    %v447 = vrot.slane %v446, 2
    %v448 = vadd.f32 %v446, %v447
    %v449 = vrot.slane %v448, 1
    %v450 = vadd.f32 %v448, %v449
    %v451 = vsel %vm283, %v415, 0.0
    %v452 = vrot.slane %v451, 4
    %v453 = vadd.f32 %v451, %v452
    %v454 = vrot.slane %v453, 2
    %v455 = vadd.f32 %v453, %v454
    %v456 = vrot.slane %v455, 1
    %v457 = vadd.f32 %v455, %v456
    %v458 = vsel %vm283, %v417, 0.0
    %v459 = vrot.slane %v458, 4
    %v460 = vadd.f32 %v458, %v459
    %v461 = vrot.slane %v460, 2
    %v462 = vadd.f32 %v460, %v461
    %v463 = vrot.slane %v462, 1
    %v464 = vadd.f32 %v462, %v463
    %v465 = vsel %vm283, %v419, 0.0
    %v466 = vrot.slane %v465, 4
    %v467 = vadd.f32 %v465, %v466
    %v468 = vrot.slane %v467, 2
    %v469 = vadd.f32 %v467, %v468
    %v470 = vrot.slane %v469, 1
    %v471 = vadd.f32 %v469, %v470
    %v472 = vsel %vm283, %v421, 0.0
    %v473 = vrot.slane %v472, 4
    %v474 = vadd.f32 %v472, %v473
    %v475 = vrot.slane %v474, 2
    %v476 = vadd.f32 %v474, %v475
    %v477 = vrot.slane %v476, 1
    %v478 = vadd.f32 %v476, %v477
    %v479 = vsel %vm283, %v423, 0.0
    %v480 = vrot.slane %v479, 4
    %v481 = vadd.f32 %v479, %v480
    %v482 = vrot.slane %v481, 2
    %v483 = vadd.f32 %v481, %v482
    %v484 = vrot.slane %v483, 1
    %v485 = vadd.f32 %v483, %v484
    %v486 = vsel %vm283, %v425, 0.0
    %v487 = vrot.slane %v486, 4
    %v488 = vadd.f32 %v486, %v487
    %v489 = vrot.slane %v488, 2
    %v490 = vadd.f32 %v488, %v489
    %v491 = vrot.slane %v490, 1
    %v492 = vadd.f32 %v490, %v491
    %v493 = vsel %vm283, %v427, 0.0
    %v494 = vrot.slane %v493, 4
    %v495 = vadd.f32 %v493, %v494
    %v496 = vrot.slane %v495, 2
    %v497 = vadd.f32 %v495, %v496
    %v498 = vrot.slane %v497, 1
    %v499 = vadd.f32 %v497, %v498
    %v500 = vsel %vm283, %v429, 0.0
    %v501 = vrot.slane %v500, 4
    %v502 = vadd.f32 %v500, %v501
    %v503 = vrot.slane %v502, 2
    %v504 = vadd.f32 %v502, %v503
    %v505 = vrot.slane %v504, 1
    %v506 = vadd.f32 %v504, %v505
    %v507 = vsel %vm283, %v431, 0.0
    %v508 = vrot.slane %v507, 4
    %v509 = vadd.f32 %v507, %v508
    %v510 = vrot.slane %v509, 2
    %v511 = vadd.f32 %v509, %v510
    %v512 = vrot.slane %v511, 1
    %v513 = vadd.f32 %v511, %v512
    %v514 = vsel %vm283, %v433, 0.0
    %v515 = vrot.slane %v514, 4
    %v516 = vadd.f32 %v514, %v515
    %v517 = vrot.slane %v516, 2
    %v518 = vadd.f32 %v516, %v517
    %v519 = vrot.slane %v518, 1
    %v520 = vadd.f32 %v518, %v519
    %v521 = vsel %vm283, %v435, 0.0
    %v522 = vrot.slane %v521, 4
    %v523 = vadd.f32 %v521, %v522
    %v524 = vrot.slane %v523, 2
    %v525 = vadd.f32 %v523, %v524
    %v526 = vrot.slane %v525, 1
    %v527 = vadd.f32 %v525, %v526
    %v528 = vsel %vm283, %v437, 0.0
    %v529 = vrot.slane %v528, 4
    %v530 = vadd.f32 %v528, %v529
    %v531 = vrot.slane %v530, 2
    %v532 = vadd.f32 %v530, %v531
    %v533 = vrot.slane %v532, 1
    %v534 = vadd.f32 %v532, %v533
    %v535 = vsel %vm283, %v439, 0.0
    %v536 = vrot.slane %v535, 4
    %v537 = vadd.f32 %v535, %v536
    %v538 = vrot.slane %v537, 2
    %v539 = vadd.f32 %v537, %v538
    %v540 = vrot.slane %v539, 1
    %v541 = vadd.f32 %v539, %v540
    %v542 = vsel %vm283, %v441, 0.0
    %v543 = vrot.slane %v542, 4
    %v544 = vadd.f32 %v542, %v543
    %v545 = vrot.slane %v544, 2
    %v546 = vadd.f32 %v544, %v545
    %v547 = vrot.slane %v546, 1
    %v548 = vadd.f32 %v546, %v547
    %v549 = vsel %vm283, %v443, 0.0
    %v550 = vrot.slane %v549, 4
    %v551 = vadd.f32 %v549, %v550
    %v552 = vrot.slane %v551, 2
    %v553 = vadd.f32 %v551, %v552
    %v554 = vrot.slane %v553, 1
    %v555 = vadd.f32 %v553, %v554
    %v556 = vrcp.pop %v450
    %v557 = vmul.f32 %v450, %v556
    %v558 = vsub.f32 1.0, %v557
    %v559 = vmul.f32 %v556, %v558
    %v560 = vadd.f32 %v556, %v559
    %vm561 = vweird.f32 %v450
    %vm562 = vweird.f32 %v556
    %vm563 = vmor %vm561, %vm562
    %v564 = vsel %vm563, %v556, %v560
    %v565 = vand.u32 2147483647, %v450
    %vm566 = vcmp.eq.f32.partialorder %v565, 8.507059e+37
    %v567 = vand.u32 %v450, 2147483648
    %v568 = vor.u32 1.1754944e-38, %v567
    %v569 = vsel %vm566, %v568, %v564
    %v570 = vrcp.pop %v457
    %v571 = vmul.f32 %v457, %v570
    %v572 = vsub.f32 1.0, %v571
    %v573 = vmul.f32 %v570, %v572
    %v574 = vadd.f32 %v570, %v573
    %vm575 = vweird.f32 %v457
    %vm576 = vweird.f32 %v570
    %vm577 = vmor %vm575, %vm576
    %v578 = vsel %vm577, %v570, %v574
    %v579 = vand.u32 2147483647, %v457
    %vm580 = vcmp.eq.f32.partialorder %v579, 8.507059e+37
    %v581 = vand.u32 %v457, 2147483648
    %v582 = vor.u32 1.1754944e-38, %v581
    %v583 = vsel %vm580, %v582, %v578
    %v584 = vrcp.pop %v464
    %v585 = vmul.f32 %v464, %v584
    %v586 = vsub.f32 1.0, %v585
    %v587 = vmul.f32 %v584, %v586
    %v588 = vadd.f32 %v584, %v587
    %vm589 = vweird.f32 %v464
    %vm590 = vweird.f32 %v584
    %vm591 = vmor %vm589, %vm590
    %v592 = vsel %vm591, %v584, %v588
    %v593 = vand.u32 2147483647, %v464
    %vm594 = vcmp.eq.f32.partialorder %v593, 8.507059e+37
    %v595 = vand.u32 %v464, 2147483648
    %v596 = vor.u32 1.1754944e-38, %v595
    %v597 = vsel %vm594, %v596, %v592
    %v598 = vrcp.pop %v471
    %v599 = vmul.f32 %v471, %v598
    %v600 = vsub.f32 1.0, %v599
    %v601 = vmul.f32 %v598, %v600
    %v602 = vadd.f32 %v598, %v601
    %vm603 = vweird.f32 %v471
    %vm604 = vweird.f32 %v598
    %vm605 = vmor %vm603, %vm604
    %v606 = vsel %vm605, %v598, %v602
    %v607 = vand.u32 2147483647, %v471
    %vm608 = vcmp.eq.f32.partialorder %v607, 8.507059e+37
    %v609 = vand.u32 %v471, 2147483648
    %v610 = vor.u32 1.1754944e-38, %v609
    %v611 = vsel %vm608, %v610, %v606
    %v612 = vrcp.pop %v478
    %v613 = vmul.f32 %v478, %v612
    %v614 = vsub.f32 1.0, %v613
    %v615 = vmul.f32 %v612, %v614
    %v616 = vadd.f32 %v612, %v615
    %vm617 = vweird.f32 %v478
    %vm618 = vweird.f32 %v612
    %vm619 = vmor %vm617, %vm618
    %v620 = vsel %vm619, %v612, %v616
    %v621 = vand.u32 2147483647, %v478
    %vm622 = vcmp.eq.f32.partialorder %v621, 8.507059e+37
    %v623 = vand.u32 %v478, 2147483648
    %v624 = vor.u32 1.1754944e-38, %v623
    %v625 = vsel %vm622, %v624, %v620
    %v626 = vrcp.pop %v485
    %v627 = vmul.f32 %v485, %v626
    %v628 = vsub.f32 1.0, %v627
    %v629 = vmul.f32 %v626, %v628
    %v630 = vadd.f32 %v626, %v629
    %vm631 = vweird.f32 %v485
    %vm632 = vweird.f32 %v626
    %vm633 = vmor %vm631, %vm632
    %v634 = vsel %vm633, %v626, %v630
    %v635 = vand.u32 2147483647, %v485
    %vm636 = vcmp.eq.f32.partialorder %v635, 8.507059e+37
    %v637 = vand.u32 %v485, 2147483648
    %v638 = vor.u32 1.1754944e-38, %v637
    %v639 = vsel %vm636, %v638, %v634
    %v640 = vrcp.pop %v492
    %v641 = vmul.f32 %v492, %v640
    %v642 = vsub.f32 1.0, %v641
    %v643 = vmul.f32 %v640, %v642
    %v644 = vadd.f32 %v640, %v643
    %vm645 = vweird.f32 %v492
    %vm646 = vweird.f32 %v640
    %vm647 = vmor %vm645, %vm646
    %v648 = vsel %vm647, %v640, %v644
    %v649 = vand.u32 2147483647, %v492
    %vm650 = vcmp.eq.f32.partialorder %v649, 8.507059e+37
    %v651 = vand.u32 %v492, 2147483648
    %v652 = vor.u32 1.1754944e-38, %v651
    %v653 = vsel %vm650, %v652, %v648
    %v654 = vrcp.pop %v499
    %v655 = vmul.f32 %v499, %v654
    %v656 = vsub.f32 1.0, %v655
    %v657 = vmul.f32 %v654, %v656
    %v658 = vadd.f32 %v654, %v657
    %vm659 = vweird.f32 %v499
    %vm660 = vweird.f32 %v654
    %vm661 = vmor %vm659, %vm660
    %v662 = vsel %vm661, %v654, %v658
    %v663 = vand.u32 2147483647, %v499
    %vm664 = vcmp.eq.f32.partialorder %v663, 8.507059e+37
    %v665 = vand.u32 %v499, 2147483648
    %v666 = vor.u32 1.1754944e-38, %v665
    %v667 = vsel %vm664, %v666, %v662
    %v668 = vrcp.pop %v506
    %v669 = vmul.f32 %v506, %v668
    %v670 = vsub.f32 1.0, %v669
    %v671 = vmul.f32 %v668, %v670
    %v672 = vadd.f32 %v668, %v671
    %vm673 = vweird.f32 %v506
    %vm674 = vweird.f32 %v668
    %vm675 = vmor %vm673, %vm674
    %v676 = vsel %vm675, %v668, %v672
    %v677 = vand.u32 2147483647, %v506
    %vm678 = vcmp.eq.f32.partialorder %v677, 8.507059e+37
    %v679 = vand.u32 %v506, 2147483648
    %v680 = vor.u32 1.1754944e-38, %v679
    %v681 = vsel %vm678, %v680, %v676
    %v682 = vrcp.pop %v513
    %v683 = vmul.f32 %v513, %v682
    %v684 = vsub.f32 1.0, %v683
    %v685 = vmul.f32 %v682, %v684
    %v686 = vadd.f32 %v682, %v685
    %vm687 = vweird.f32 %v513
    %vm688 = vweird.f32 %v682
    %vm689 = vmor %vm687, %vm688
    %v690 = vsel %vm689, %v682, %v686
    %v691 = vand.u32 2147483647, %v513
    %vm692 = vcmp.eq.f32.partialorder %v691, 8.507059e+37
    %v693 = vand.u32 %v513, 2147483648
    %v694 = vor.u32 1.1754944e-38, %v693
    %v695 = vsel %vm692, %v694, %v690
    %v696 = vrcp.pop %v520
    %v697 = vmul.f32 %v520, %v696
    %v698 = vsub.f32 1.0, %v697
    %v699 = vmul.f32 %v696, %v698
    %v700 = vadd.f32 %v696, %v699
    %vm701 = vweird.f32 %v520
    %vm702 = vweird.f32 %v696
    %vm703 = vmor %vm701, %vm702
    %v704 = vsel %vm703, %v696, %v700
    %v705 = vand.u32 2147483647, %v520
    %vm706 = vcmp.eq.f32.partialorder %v705, 8.507059e+37
    %v707 = vand.u32 %v520, 2147483648
    %v708 = vor.u32 1.1754944e-38, %v707
    %v709 = vsel %vm706, %v708, %v704
    %v710 = vrcp.pop %v527
    %v711 = vmul.f32 %v527, %v710
    %v712 = vsub.f32 1.0, %v711
    %v713 = vmul.f32 %v710, %v712
    %v714 = vadd.f32 %v710, %v713
    %vm715 = vweird.f32 %v527
    %vm716 = vweird.f32 %v710
    %vm717 = vmor %vm715, %vm716
    %v718 = vsel %vm717, %v710, %v714
    %v719 = vand.u32 2147483647, %v527
    %vm720 = vcmp.eq.f32.partialorder %v719, 8.507059e+37
    %v721 = vand.u32 %v527, 2147483648
    %v722 = vor.u32 1.1754944e-38, %v721
    %v723 = vsel %vm720, %v722, %v718
    %v724 = vrcp.pop %v534
    %v725 = vmul.f32 %v534, %v724
    %v726 = vsub.f32 1.0, %v725
    %v727 = vmul.f32 %v724, %v726
    %v728 = vadd.f32 %v724, %v727
    %vm729 = vweird.f32 %v534
    %vm730 = vweird.f32 %v724
    %vm731 = vmor %vm729, %vm730
    %v732 = vsel %vm731, %v724, %v728
    %v733 = vand.u32 2147483647, %v534
    %vm734 = vcmp.eq.f32.partialorder %v733, 8.507059e+37
    %v735 = vand.u32 %v534, 2147483648
    %v736 = vor.u32 1.1754944e-38, %v735
    %v737 = vsel %vm734, %v736, %v732
    %v738 = vrcp.pop %v541
    %v739 = vmul.f32 %v541, %v738
    %v740 = vsub.f32 1.0, %v739
    %v741 = vmul.f32 %v738, %v740
    %v742 = vadd.f32 %v738, %v741
    %vm743 = vweird.f32 %v541
    %vm744 = vweird.f32 %v738
    %vm745 = vmor %vm743, %vm744
    %v746 = vsel %vm745, %v738, %v742
    %v747 = vand.u32 2147483647, %v541
    %vm748 = vcmp.eq.f32.partialorder %v747, 8.507059e+37
    %v749 = vand.u32 %v541, 2147483648
    %v750 = vor.u32 1.1754944e-38, %v749
    %v751 = vsel %vm748, %v750, %v746
    %v752 = vrcp.pop %v548
    %v753 = vmul.f32 %v548, %v752
    %v754 = vsub.f32 1.0, %v753
    %v755 = vmul.f32 %v752, %v754
    %v756 = vadd.f32 %v752, %v755
    %vm757 = vweird.f32 %v548
    %vm758 = vweird.f32 %v752
    %vm759 = vmor %vm757, %vm758
    %v760 = vsel %vm759, %v752, %v756
    %v761 = vand.u32 2147483647, %v548
    %vm762 = vcmp.eq.f32.partialorder %v761, 8.507059e+37
    %v763 = vand.u32 %v548, 2147483648
    %v764 = vor.u32 1.1754944e-38, %v763
    %v765 = vsel %vm762, %v764, %v760
    %v766 = vrcp.pop %v555
    %v767 = vmul.f32 %v555, %v766
    %v768 = vsub.f32 1.0, %v767
    %v769 = vmul.f32 %v766, %v768
    %v770 = vadd.f32 %v766, %v769
    %vm771 = vweird.f32 %v555
    %vm772 = vweird.f32 %v766
    %vm773 = vmor %vm771, %vm772
    %v774 = vsel %vm773, %v766, %v770
    %v775 = vand.u32 2147483647, %v555
    %vm776 = vcmp.eq.f32.partialorder %v775, 8.507059e+37
    %v777 = vand.u32 %v555, 2147483648
    %v778 = vor.u32 1.1754944e-38, %v777
    %v779 = vsel %vm776, %v778, %v774
    %v780 = vmul.f32 %v413, %v569
    %v781 = vmul.f32 %v415, %v583
    %v782 = vmul.f32 %v417, %v597
    %v783 = vmul.f32 %v419, %v611
    %v784 = vmul.f32 %v421, %v625
    %v785 = vmul.f32 %v423, %v639
    %v786 = vmul.f32 %v425, %v653
    %v787 = vmul.f32 %v427, %v667
    %v788 = vmul.f32 %v429, %v681
    %v789 = vmul.f32 %v431, %v695
    %v790 = vmul.f32 %v433, %v709
    %v791 = vmul.f32 %v435, %v723
    %v792 = vmul.f32 %v437, %v737
    %v793 = vmul.f32 %v439, %v751
    %v794 = vmul.f32 %v441, %v765
    %v795 = vmul.f32 %v443, %v779
    %v796 = vld [vmem:[%s5] sm:$0xff]
    %v798 = vsel %vm283, %v780, 0
    %v801 = vsel %vm283, %v781, 0
    %v804 = vsel %vm283, %v782, 0
    %v807 = vsel %vm283, %v783, 0
    %v810 = vsel %vm283, %v784, 0
    %v813 = vsel %vm283, %v785, 0
    %v816 = vsel %vm283, %v786, 0
    %v819 = vsel %vm283, %v787, 0
    %v822 = vsel %vm283, %v788, 0
    %v825 = vsel %vm283, %v789, 0
    %v828 = vsel %vm283, %v790, 0
    %v831 = vsel %vm283, %v791, 0
    %v834 = vsel %vm283, %v792, 0
    %v837 = vsel %vm283, %v793, 0
    %v840 = vsel %vm283, %v794, 0
    %v843 = vsel %vm283, %v795, 0
    %845 = vmatpush.msra.mxu0 0.0
    %846 = vmatpush.msra.mxu0 0.0
    %847 = vmatpush.msra.mxu0 0.0
    %848 = vmatpush.msra.mxu0 0.0
    %849 = vmatpush.msra.mxu0 0.0
    %850 = vmatpush.msra.mxu0 0.0
    %851 = vmatpush.msra.mxu0 0.0
    %852 = vmatpush.msra.mxu0 0.0
    %853 = vmatpush.msra.mxu0 0.0
    %854 = vmatpush.msra.mxu0 0.0
    %855 = vmatpush.msra.mxu0 0.0
    %856 = vmatpush.msra.mxu0 0.0
    %857 = vmatpush.msra.mxu0 0.0
    %858 = vmatpush.msra.mxu0 0.0
    %859 = vmatpush.msra.mxu0 0.0
    %860 = vmatpush.msra.mxu0 %v796
    %861 = vmatmul.f32.gmra.mxu0 %v798
    %v862 = vpop.f32.mrf.mxu0
    %v863 = vadd.f32 0.0, %v862
    %864 = vmatmul.f32.gmra.mxu0 %v801
    %v865 = vpop.f32.mrf.mxu0
    %v866 = vadd.f32 0.0, %v865
    %867 = vmatmul.f32.gmra.mxu0 %v804
    %v868 = vpop.f32.mrf.mxu0
    %v869 = vadd.f32 0.0, %v868
    %870 = vmatmul.f32.gmra.mxu0 %v807
    %v871 = vpop.f32.mrf.mxu0
    %v872 = vadd.f32 0.0, %v871
    %873 = vmatmul.f32.gmra.mxu0 %v810
    %v874 = vpop.f32.mrf.mxu0
    %v875 = vadd.f32 0.0, %v874
    %876 = vmatmul.f32.gmra.mxu0 %v813
    %v877 = vpop.f32.mrf.mxu0
    %v878 = vadd.f32 0.0, %v877
    %879 = vmatmul.f32.gmra.mxu0 %v816
    %v880 = vpop.f32.mrf.mxu0
    %v881 = vadd.f32 0.0, %v880
    %882 = vmatmul.f32.gmra.mxu0 %v819
    %v883 = vpop.f32.mrf.mxu0
    %v884 = vadd.f32 0.0, %v883
    %885 = vmatmul.f32.gmra.mxu0 %v822
    %v886 = vpop.f32.mrf.mxu0
    %v887 = vadd.f32 0.0, %v886
    %888 = vmatmul.f32.gmra.mxu0 %v825
    %v889 = vpop.f32.mrf.mxu0
    %v890 = vadd.f32 0.0, %v889
    %891 = vmatmul.f32.gmra.mxu0 %v828
    %v892 = vpop.f32.mrf.mxu0
    %v893 = vadd.f32 0.0, %v892
    %894 = vmatmul.f32.gmra.mxu0 %v831
    %v895 = vpop.f32.mrf.mxu0
    %v896 = vadd.f32 0.0, %v895
    %897 = vmatmul.f32.gmra.mxu0 %v834
    %v898 = vpop.f32.mrf.mxu0
    %v899 = vadd.f32 0.0, %v898
    %900 = vmatmul.f32.gmra.mxu0 %v837
    %v901 = vpop.f32.mrf.mxu0
    %v902 = vadd.f32 0.0, %v901
    %903 = vmatmul.f32.gmra.mxu0 %v840
    %v904 = vpop.f32.mrf.mxu0
    %v905 = vadd.f32 0.0, %v904
    %906 = vmatmul.f32.gmra.mxu0 %v843
    %v907 = vpop.f32.mrf.mxu0
    %v908 = vadd.f32 0.0, %v907
    %909 = vdwg.mxu0
    %910 = vrot.lane.b32.xlu0 %v87, 64
    %v911 = vpop.permute.xlu0 %910
    %912 = vrot.lane.b32.xlu0 %v90, 64
    %v913 = vpop.permute.xlu0 %912
    %v916 = vmul.f32 %v863, %v911
    %v917 = vmul.f32 %v866, %v911
    %v918 = vmul.f32 %v869, %v911
    %v919 = vmul.f32 %v872, %v911
    %v920 = vmul.f32 %v875, %v911
    %v921 = vmul.f32 %v878, %v911
    %v922 = vmul.f32 %v881, %v911
    %v923 = vmul.f32 %v884, %v911
    %v924 = vmul.f32 %v887, %v913
    %v925 = vmul.f32 %v890, %v913
    %v926 = vmul.f32 %v893, %v913
    %v927 = vmul.f32 %v896, %v913
    %v928 = vmul.f32 %v899, %v913
    %v929 = vmul.f32 %v902, %v913
    %v930 = vmul.f32 %v905, %v913
    %v931 = vmul.f32 %v908, %v913
    %v932 = vsel %vm62, %v916, 0.0
    %v933 = vrot.slane %v932, 4
    %v934 = vadd.f32 %v932, %v933
    %v935 = vrot.slane %v934, 2
    %v936 = vadd.f32 %v934, %v935
    %v937 = vrot.slane %v936, 1
    %v938 = vadd.f32 %v936, %v937
    %v939 = vsel %vm62, %v917, 0.0
    %v940 = vrot.slane %v939, 4
    %v941 = vadd.f32 %v939, %v940
    %v942 = vrot.slane %v941, 2
    %v943 = vadd.f32 %v941, %v942
    %v944 = vrot.slane %v943, 1
    %v945 = vadd.f32 %v943, %v944
    %v946 = vsel %vm62, %v918, 0.0
    %v947 = vrot.slane %v946, 4
    %v948 = vadd.f32 %v946, %v947
    %v949 = vrot.slane %v948, 2
    %v950 = vadd.f32 %v948, %v949
    %v951 = vrot.slane %v950, 1
    %v952 = vadd.f32 %v950, %v951
    %v953 = vsel %vm62, %v919, 0.0
    %v954 = vrot.slane %v953, 4
    %v955 = vadd.f32 %v953, %v954
    %v956 = vrot.slane %v955, 2
    %v957 = vadd.f32 %v955, %v956
    %v958 = vrot.slane %v957, 1
    %v959 = vadd.f32 %v957, %v958
    %v960 = vsel %vm62, %v920, 0.0
    %v961 = vrot.slane %v960, 4
    %v962 = vadd.f32 %v960, %v961
    %v963 = vrot.slane %v962, 2
    %v964 = vadd.f32 %v962, %v963
    %v965 = vrot.slane %v964, 1
    %v966 = vadd.f32 %v964, %v965
    %v967 = vsel %vm62, %v921, 0.0
    %v968 = vrot.slane %v967, 4
    %v969 = vadd.f32 %v967, %v968
    %v970 = vrot.slane %v969, 2
    %v971 = vadd.f32 %v969, %v970
    %v972 = vrot.slane %v971, 1
    %v973 = vadd.f32 %v971, %v972
    %v974 = vsel %vm62, %v922, 0.0
    %v975 = vrot.slane %v974, 4
    %v976 = vadd.f32 %v974, %v975
    %v977 = vrot.slane %v976, 2
    %v978 = vadd.f32 %v976, %v977
    %v979 = vrot.slane %v978, 1
    %v980 = vadd.f32 %v978, %v979
    %v981 = vsel %vm62, %v923, 0.0
    %v982 = vrot.slane %v981, 4
    %v983 = vadd.f32 %v981, %v982
    %v984 = vrot.slane %v983, 2
    %v985 = vadd.f32 %v983, %v984
    %v986 = vrot.slane %v985, 1
    %v987 = vadd.f32 %v985, %v986
    %v988 = vsel %vm62, %v924, 0.0
    %v989 = vrot.slane %v988, 4
    %v990 = vadd.f32 %v988, %v989
    %v991 = vrot.slane %v990, 2
    %v992 = vadd.f32 %v990, %v991
    %v993 = vrot.slane %v992, 1
    %v994 = vadd.f32 %v992, %v993
    %v995 = vsel %vm62, %v925, 0.0
    %v996 = vrot.slane %v995, 4
    %v997 = vadd.f32 %v995, %v996
    %v998 = vrot.slane %v997, 2
    %v999 = vadd.f32 %v997, %v998
    %v1000 = vrot.slane %v999, 1
    %v1001 = vadd.f32 %v999, %v1000
    %v1002 = vsel %vm62, %v926, 0.0
    %v1003 = vrot.slane %v1002, 4
    %v1004 = vadd.f32 %v1002, %v1003
    %v1005 = vrot.slane %v1004, 2
    %v1006 = vadd.f32 %v1004, %v1005
    %v1007 = vrot.slane %v1006, 1
    %v1008 = vadd.f32 %v1006, %v1007
    %v1009 = vsel %vm62, %v927, 0.0
    %v1010 = vrot.slane %v1009, 4
    %v1011 = vadd.f32 %v1009, %v1010
    %v1012 = vrot.slane %v1011, 2
    %v1013 = vadd.f32 %v1011, %v1012
    %v1014 = vrot.slane %v1013, 1
    %v1015 = vadd.f32 %v1013, %v1014
    %v1016 = vsel %vm62, %v928, 0.0
    %v1017 = vrot.slane %v1016, 4
    %v1018 = vadd.f32 %v1016, %v1017
    %v1019 = vrot.slane %v1018, 2
    %v1020 = vadd.f32 %v1018, %v1019
    %v1021 = vrot.slane %v1020, 1
    %v1022 = vadd.f32 %v1020, %v1021
    %v1023 = vsel %vm62, %v929, 0.0
    %v1024 = vrot.slane %v1023, 4
    %v1025 = vadd.f32 %v1023, %v1024
    %v1026 = vrot.slane %v1025, 2
    %v1027 = vadd.f32 %v1025, %v1026
    %v1028 = vrot.slane %v1027, 1
    %v1029 = vadd.f32 %v1027, %v1028
    %v1030 = vsel %vm62, %v930, 0.0
    %v1031 = vrot.slane %v1030, 4
    %v1032 = vadd.f32 %v1030, %v1031
    %v1033 = vrot.slane %v1032, 2
    %v1034 = vadd.f32 %v1032, %v1033
    %v1035 = vrot.slane %v1034, 1
    %v1036 = vadd.f32 %v1034, %v1035
    %v1037 = vsel %vm62, %v931, 0.0
    %v1038 = vrot.slane %v1037, 4
    %v1039 = vadd.f32 %v1037, %v1038
    %v1040 = vrot.slane %v1039, 2
    %v1041 = vadd.f32 %v1039, %v1040
    %v1042 = vrot.slane %v1041, 1
    %v1043 = vadd.f32 %v1041, %v1042
    %v1044 = vld [vmem:[#allocation5] sm:$0xff]
    %v1045 = vld [vmem:[#allocation5 + $0x8] sm:$0xff]
    %v1046 = vld [vmem:[#allocation5 + $0x10] sm:$0xff]
    %v1047 = vld [vmem:[#allocation5 + $0x18] sm:$0xff]
    %v1048 = vld [vmem:[%s3] sm:$0x1]
    %v1050 = vperm.slane %v1048, 0
    %vm1068 = vcmask 1041409
    %v1069 = vsel %vm1068, %v945, %v938
    %vm1070 = vcmask 1042434
    %v1071 = vsel %vm1070, %v952, %v1069
    %vm1072 = vcmask 1043459
    %v1073 = vsel %vm1072, %v959, %v1071
    %vm1074 = vcmask 1044484
    %v1075 = vsel %vm1074, %v966, %v1073
    %vm1076 = vcmask 1045509
    %v1077 = vsel %vm1076, %v973, %v1075
    %vm1078 = vcmask 1046534
    %v1079 = vsel %vm1078, %v980, %v1077
    %vm1080 = vcmask 1047559
    %v1081 = vsel %vm1080, %v987, %v1079
    %v1082 = vsel %vm1068, %v1001, %v994
    %v1083 = vsel %vm1070, %v1008, %v1082
    %v1084 = vsel %vm1072, %v1015, %v1083
    %v1085 = vsel %vm1074, %v1022, %v1084
    %v1086 = vsel %vm1076, %v1029, %v1085
    %v1087 = vsel %vm1078, %v1036, %v1086
    %v1088 = vsel %vm1080, %v1043, %v1087
    %v1089 = vsel %vm62, %v1081, 0
    %v1091 = vsel %vm62, %v1088, 0
    %1093 = vmatpush.msra.mxu0 0.0
    %1094 = vmatpush.msra.mxu0 0.0
    %1095 = vmatpush.msra.mxu0 0.0
    %1096 = vmatpush.msra.mxu0 0.0
    %1097 = vmatpush.msra.mxu0 0.0
    %1098 = vmatpush.msra.mxu0 0.0
    %1099 = vmatpush.msra.mxu0 0.0
    %1100 = vmatpush.msra.mxu0 0.0
    %1101 = vmatpush.msra.mxu0 0.0
    %1102 = vmatpush.msra.mxu0 0.0
    %1103 = vmatpush.msra.mxu0 0.0
    %1104 = vmatpush.msra.mxu0 0.0
    %1105 = vmatpush.msra.mxu0 %v1047
    %1106 = vmatpush.msra.mxu0 %v1046
    %1107 = vmatpush.msra.mxu0 %v1045
    %1108 = vmatpush.msra.mxu0 %v1044
    %1109 = vmatmul.f32.gmra.mxu0 %v1089
    %v1110 = vpop.f32.mrf.mxu0
    %v1111 = vadd.f32 %v1050, %v1110
    %1112 = vmatmul.f32.gmra.mxu0 %v1091
    %v1113 = vpop.f32.mrf.mxu0
    %v1114 = vadd.f32 %v1050, %v1113
    %1115 = vdwg.mxu0
    %1116 = vst.msk [vmem:[#allocation7] sm:$0xff] %vm62, %v1111
    %1117 = vst.msk [vmem:[#allocation7 + $0x8] sm:$0xff] %vm62, %v1114
    // Predicated region
    $region34: #{tpu_custom_call.1} parent=1 // pred_check
      _
    $region35: #{tpu_custom_call.1} parent=1 // pred_check_branch
      %1119 = sbr.rel (0) target = $region37
    $region36: #{tpu_custom_call.1} parent=1 // pred_region
      %1121 = vsyncadd [#allocation4], 0
      %s1122 = sshll.u32 [#allocation7], 4
      %s1123 = int_to_ptr.vmem [resolvable:$true] %s1122
      %s1124 = sshll.u32 %s6, 4
      %s1125 = int_to_ptr.hbm [resolvable:$true] %s1124
      %1130 = dma.vmem_to_hbm [thread:$0]  %s1123, 256, %s1125, [#allocation4], 128, 128, 8
    $region37: #{tpu_custom_call.1} parent=1 // pred_fallthru
      _
    // Predicated region
    $region38: #{tpu_custom_call.1} parent=1 // pred_check
      _
    $region39: #{tpu_custom_call.1} parent=1 // pred_check_branch
      %1132 = sbr.rel (0) target = $region41
    $region40: #{tpu_custom_call.1} parent=1 // pred_region
      %1134 = dma.done [#allocation4], 256
    $region41: #{tpu_custom_call.1} parent=1 // pred_fallthru
      _
    %1135 = vsyncpa [#allocation3], 1
    %1136 = vsyncpa [#allocation6], 1
    %1137 = vsyncpa [#allocation4], 1

</llo_original>
